<compile_context>
chip_gen: v6e
topology: v6e:2x2x1
jax: 0.10.0
libtpu: 0.0.40
codegen_flags: <defaults>
</compile_context>

<pallas_src>
import jax
import jax.numpy as jnp
from jax.experimental import pallas as pl
from jax.experimental.pallas import tpu as pltpu

LANE, SUB = 128, 8


def _round_up(x, m):
    return ((x + m - 1) // m) * m


def _footprint_bytes(tb, din_p, hid_p, dout_p):
    """Approximate VMEM footprint of one grid step (with pipelining buffers)."""
    x_b = 2 * tb * din_p * 2            # bf16 x tile, double-buffered
    o_b = 2 * tb * dout_p * 4           # f32 out tile, double-buffered
    w_b = (din_p * hid_p + hid_p * dout_p) * 2   # resident bf16 weights (Buffered(1))
    tmp = tb * (hid_p + dout_p) * 4     # in-kernel f32 h / logits temporaries
    return x_b + o_b + w_b + tmp


def _resident_spec(shape):
    """Constant-index weight block: stays in VMEM; single-buffer if supported."""
    index_map = lambda i: (0, 0)
    if hasattr(pl, "Buffered"):
        try:
            return pl.BlockSpec(shape, index_map, pipeline_mode=pl.Buffered(1))
        except TypeError:
            pass  # older BlockSpec signature without pipeline_mode
    return pl.BlockSpec(shape, index_map)


def _bnn_kernel(x_ref, w1_ref, w2_ref, o_ref):
    # layer 1: bf16 MXU operands, f32 accumulation, ReLU on the VPU.
    h = jnp.dot(x_ref[...], w1_ref[...], preferred_element_type=jnp.float32)
    h = jnp.maximum(h, 0.0)
    # layer 2 + sigmoid (EUP).  Padded hidden columns of h are exactly zero
    # because the padded w1 columns are zero, so no masking is needed.
    logits = jnp.dot(h.astype(jnp.bfloat16), w2_ref[...],
                     preferred_element_type=jnp.float32)
    o_ref[...] = jax.nn.sigmoid(logits).astype(o_ref.dtype)


def bnn_alpha_forward(x, mu1, rho1, mu2, rho2, *, seed=0, eps=None,
                      block_batch=512):
    """BNN_Alpha forward.

    x         : (B, in_features)       float32
    mu1, rho1 : (hidden, in_features)  (PyTorch (out, in) layout)
    mu2, rho2 : (out_features, hidden)
    eps       : None -> sample fresh reparameterization noise (per forward);
                (eps1, eps2) in PyTorch layout -> use supplied noise (testing).
    """
    B, d_in = x.shape
    hidden = mu1.shape[0]
    d_out = mu2.shape[0]

    # ---- weight sample: built ONCE per forward in the wrapper (hoisted) ----
    if eps is None:
        k1, k2 = jax.random.split(jax.random.PRNGKey(seed))
        eps1 = jax.random.normal(k1, mu1.shape, jnp.float32)
        eps2 = jax.random.normal(k2, mu2.shape, jnp.float32)
    else:
        eps1, eps2 = eps
    w1 = mu1.astype(jnp.float32) + jax.nn.softplus(rho1.astype(jnp.float32)) * eps1
    w2 = mu2.astype(jnp.float32) + jax.nn.softplus(rho2.astype(jnp.float32)) * eps2

    # ---- padding / tiling ----
    din_p = _round_up(d_in, LANE)
    hid_p = _round_up(hidden, LANE)
    dout_p = _round_up(d_out, LANE)

    tb = min(block_batch, _round_up(B, SUB))
    if B > SUB:  # >= 2 grid steps so both v7x TensorCores get work
        tb = min(tb, _round_up(-(-B // 2), SUB))
    tb = max(tb, SUB)
    # shrink the batch tile until the footprint fits a v7x-safe VMEM budget
    while tb > SUB and _footprint_bytes(tb, din_p, hid_p, dout_p) > (48 << 20):
        tb = max(SUB, _round_up(tb // 2, SUB))
    b_p = _round_up(B, tb)

    def pad2(a, rows, cols, dtype):
        a = a.astype(jnp.float32)
        a = jnp.pad(a, ((0, rows - a.shape[0]), (0, cols - a.shape[1])))
        return a.astype(dtype)

    # pre-transposed (in, out) layout, bf16, zero padding -> no in-kernel
    # transpose, lane-dense output, no mask needed.
    x_p = pad2(x, b_p, din_p, jnp.bfloat16)
    w1_t = pad2(w1.T, din_p, hid_p, jnp.bfloat16)
    w2_t = pad2(w2.T, hid_p, dout_p, jnp.bfloat16)

    footprint = _footprint_bytes(tb, din_p, hid_p, dout_p)
    vmem_limit = int(min(64 << 20, max(32 << 20, 2 * footprint + (4 << 20))))

    grid = (b_p // tb,)
    out_p = pl.pallas_call(
        _bnn_kernel,
        out_shape=jax.ShapeDtypeStruct((b_p, dout_p), jnp.float32),
        grid=grid,
        in_specs=[pl.BlockSpec((tb, din_p), lambda i: (i, 0)),
                  _resident_spec((din_p, hid_p)),
                  _resident_spec((hid_p, dout_p))],
        out_specs=pl.BlockSpec((tb, dout_p), lambda i: (i, 0)),
        compiler_params=pltpu.CompilerParams(
            dimension_semantics=("parallel",),
            vmem_limit_bytes=vmem_limit),
    )(x_p, w1_t, w2_t)

    return out_p[:B, :d_out]


if __name__ == "__main__":
    # Small shapes consistent with BNN_Alpha(input_dim, hidden_dim, output_dim).
    batch, input_dim, hidden_dim, output_dim = 256, 16, 32, 4

    key = jax.random.PRNGKey(0)
    k_x, k_mu1, k_rho1, k_mu2, k_rho2, k_eps1, k_eps2 = jax.random.split(key, 7)

    x = jax.random.normal(k_x, (batch, input_dim), dtype=jnp.float32)
    # Mirror the PyTorch __init__:  mu = randn*0.1, rho = randn*(-3.0).
    mu1 = jax.random.normal(k_mu1, (hidden_dim, input_dim), jnp.float32) * 0.1
    rho1 = jax.random.normal(k_rho1, (hidden_dim, input_dim), jnp.float32) * -3.0
    mu2 = jax.random.normal(k_mu2, (output_dim, hidden_dim), jnp.float32) * 0.1
    rho2 = jax.random.normal(k_rho2, (output_dim, hidden_dim), jnp.float32) * -3.0

    # ---- path 1: validation with externally supplied eps (checkable math) ----
    eps1 = jax.random.normal(k_eps1, (hidden_dim, input_dim), jnp.float32)
    eps2 = jax.random.normal(k_eps2, (output_dim, hidden_dim), jnp.float32)
    out_fixed = jax.block_until_ready(
        bnn_alpha_forward(x, mu1, rho1, mu2, rho2, eps=(eps1, eps2)))

    # Pure-JAX reference with the same bf16-operand / f32-accumulate matmuls,
    # so any residual difference is accumulation-order only.
    w1 = mu1 + jax.nn.softplus(rho1) * eps1
    w2 = mu2 + jax.nn.softplus(rho2) * eps2
    h_ref = jnp.maximum(
        jnp.dot(x.astype(jnp.bfloat16), w1.T.astype(jnp.bfloat16),
                preferred_element_type=jnp.float32), 0.0)
    ref = jax.nn.sigmoid(
        jnp.dot(h_ref.astype(jnp.bfloat16), w2.T.astype(jnp.bfloat16),
                preferred_element_type=jnp.float32))
    assert out_fixed.shape == (batch, output_dim)
    err = float(jnp.max(jnp.abs(out_fixed - ref)))
    assert jnp.allclose(out_fixed, ref, atol=5e-3, rtol=5e-3), err

    # ---- path 2: production path, fresh noise per forward ----
    out_rng = jax.block_until_ready(
        bnn_alpha_forward(x, mu1, rho1, mu2, rho2, seed=42))
    assert out_rng.shape == (batch, output_dim)
    assert bool(jnp.all(jnp.isfinite(out_rng)))
    assert bool(jnp.all((out_rng >= 0.0) & (out_rng <= 1.0)))

    # TODO(synk): alpha_div() (the alpha-divergence regularizer) is a training-
    # time loss term, not part of forward(), and is not implemented as a kernel.
    print("KERNEL_OK")
</pallas_src>

<mosaic_0001>
module attributes {stable_mosaic.version = 11 : i64} {
  func.func @_bnn_kernel(%arg0: i32, %arg1: memref<128x128xbf16, #tpu.memory_space<vmem>>, %arg2: memref<128x128xbf16, #tpu.memory_space<vmem>>, %arg3: memref<128x128xbf16, #tpu.memory_space<vmem>>, %arg4: memref<128x128xf32, #tpu.memory_space<vmem>>) attributes {dimension_semantics = [#tpu.dimension_semantics<parallel>], iteration_bounds = array<i64: 2>, scalar_prefetch = 0 : i64, scratch_operands = 0 : i64, tpu.core_type = #tpu.core_type<tc>, window_params = [{transform_indices = @transform_0, window_bounds = array<i64: 128, 128>}, {pipeline_mode = #tpu.pipeline_mode<synchronous>, transform_indices = @transform_1, window_bounds = array<i64: 128, 128>}, {pipeline_mode = #tpu.pipeline_mode<synchronous>, transform_indices = @transform_2, window_bounds = array<i64: 128, 128>}, {transform_indices = @transform_3, window_bounds = array<i64: 128, 128>}]} {
    %c0 = arith.constant 0 : index
    %c0_0 = arith.constant 0 : index
    %0 = vector.load %arg1[%c0, %c0_0] : memref<128x128xbf16, #tpu.memory_space<vmem>>, vector<128x128xbf16>
    %c0_1 = arith.constant 0 : index
    %c0_2 = arith.constant 0 : index
    %1 = vector.load %arg2[%c0_1, %c0_2] : memref<128x128xbf16, #tpu.memory_space<vmem>>, vector<128x128xbf16>
    %cst = arith.constant dense<0.000000e+00> : vector<128x128xf32>
    %2 = tpu.matmul %0, %1, %cst {dimension_numbers = #tpu.dot_dimension_numbers<[1], [0], [0], [1], [0, 0, 1, 1], [], []>} : vector<128x128xbf16>, vector<128x128xbf16>, vector<128x128xf32> -> vector<128x128xf32>
    %cst_3 = arith.constant 0.000000e+00 : f32
    %3 = vector.broadcast %cst_3 : f32 to vector<128x128xf32>
    %4 = arith.maximumf %2, %3 : vector<128x128xf32>
    %5 = arith.truncf %4 : vector<128x128xf32> to vector<128x128xbf16>
    %c0_4 = arith.constant 0 : index
    %c0_5 = arith.constant 0 : index
    %6 = vector.load %arg3[%c0_4, %c0_5] : memref<128x128xbf16, #tpu.memory_space<vmem>>, vector<128x128xbf16>
    %cst_6 = arith.constant dense<0.000000e+00> : vector<128x128xf32>
    %7 = tpu.matmul %5, %6, %cst_6 {dimension_numbers = #tpu.dot_dimension_numbers<[1], [0], [0], [1], [0, 0, 1, 1], [], []>} : vector<128x128xbf16>, vector<128x128xbf16>, vector<128x128xf32> -> vector<128x128xf32>
    %8 = arith.negf %7 : vector<128x128xf32>
    %9 = math.exp %8 : vector<128x128xf32>
    %cst_7 = arith.constant 1.000000e+00 : f32
    %10 = vector.broadcast %cst_7 : f32 to vector<128x128xf32>
    %11 = arith.addf %10, %9 : vector<128x128xf32>
    %12 = arith.divf %10, %11 : vector<128x128xf32>
    %c0_8 = arith.constant 0 : index
    %c0_9 = arith.constant 0 : index
    %13 = vector.load %arg4[%c0_8, %c0_9] : memref<128x128xf32, #tpu.memory_space<vmem>>, vector<128x128xf32>
    tpu.vector_store %arg4[%c0_8, %c0_9], %12 {strides = array<i32>} : memref<128x128xf32, #tpu.memory_space<vmem>>, vector<128x128xf32>,
    return
  }
  func.func @transform_0(%arg0: i32) -> (i32, i32) {
    %c0_i32 = arith.constant 0 : i32
    %c0_i32_0 = arith.constant 0 : i32
    return %arg0, %c0_i32 : i32, i32
  }
  func.func @transform_1(%arg0: i32) -> (i32, i32) {
    %c0_i32 = arith.constant 0 : i32
    %c0_i32_0 = arith.constant 0 : i32
    %c0_i32_1 = arith.constant 0 : i32
    return %c0_i32, %c0_i32_0 : i32, i32
  }
  func.func @transform_2(%arg0: i32) -> (i32, i32) {
    %c0_i32 = arith.constant 0 : i32
    %c0_i32_0 = arith.constant 0 : i32
    %c0_i32_1 = arith.constant 0 : i32
    return %c0_i32, %c0_i32_0 : i32, i32
  }
  func.func @transform_3(%arg0: i32) -> (i32, i32) {
    %c0_i32 = arith.constant 0 : i32
    %c0_i32_0 = arith.constant 0 : i32
    return %arg0, %c0_i32 : i32, i32
  }
}

</mosaic_0001>

<llo_original>
// kernel: tpu_custom_call.1
$region0: #{tpu_custom_call.1}
  #allocation0 [shape = 'u32[]', space=smem, size = 0x4, offset = 0x4, fixed_abs, tag = 'smem constant byte address 0x4 - core index']
  #allocation1 [shape = 'u32[144,128]{1,0:T(1,128)}', space=vmem, size = 0x12000, scoped, tag = 'internal scratch']
  %s0 = inlined_call_operand.hbm [shape: bf16[256,128], index: 0, kind: input, shape index: {}]
  %s1 = inlined_call_operand.hbm [shape: bf16[128,128], index: 1, kind: input, shape index: {}]
  %s2 = inlined_call_operand.hbm [shape: bf16[128,128], index: 2, kind: input, shape index: {}]
  %s3 = inlined_call_operand.hbm [shape: f32[256,128], index: 3, kind: output, shape index: {}]
  %s4 = sld [smem:[#allocation0]]
  $region57: #{tpu_custom_call.1} parent=0
    _
  %s6 = ssub.s32 1, %s4
  %s7 = scalar_select 0, %s6, %s4
  $region1: #{tpu_custom_call.1} parent=0
    #allocation2 [shape = 'u8[65536]{0}', space=vmem, size = 0x10000, scoped, tag = 'input window, operand 0']
    #allocation3 [shape = 's32[2]{0}', space=sflag, size = 0x8, scoped, tag = 'scoped memory for tpu_custom_call.1']
    #allocation4 [shape = 's32[2]{0}', space=sflag, size = 0x8, scoped, tag = 'scoped memory for tpu_custom_call.1']
    #allocation5 [shape = 'u8[32768]{0}', space=vmem, size = 0x8000, scoped, tag = 'input window, operand 1, single buffered']
    #allocation6 [shape = 's32[1]{0}', space=sflag, size = 0x4, scoped, tag = 'scoped memory for tpu_custom_call.1']
    #allocation7 [shape = 'u8[32768]{0}', space=vmem, size = 0x8000, scoped, tag = 'input window, operand 2, single buffered']
    #allocation8 [shape = 'u8[131072]{0}', space=vmem, size = 0x20000, scoped, tag = 'output window, operand 0']
    %8 = vsyncpa [#allocation3], 0
    %s9 = scalar_lea.sflag [#allocation3], 1
    %10 = vsyncpa %s9, 0
    %11 = vsyncpa [#allocation6], 0
    %12 = vsyncpa [#allocation4], 0
    %s13 = scalar_lea.sflag [#allocation4], 1
    %14 = vsyncpa %s13, 0
    loop: start=0, step=1, limit=4
    $region2: #{tpu_custom_call.1} parent=1 // loop_pre_header
      _
    $region3: #{tpu_custom_call.1} parent=1 // loop_header
      %s16 = sphi 0, %s20
      %p17 = scmp.ge.s32.totalorder %s16, 4
      %s26 = sphi 0, %s28
      %s29 = sphi 0, %s26
      %s30 = sphi 0, %s29
      %s46 = sphi 0, %s30
      %s50 = sphi 0, %s50
      %s52 = sphi 0, %s50
      %s53 = sphi 0, %s52
      %s67 = sphi 0, %s53
      %s71 = sphi 0, %s71
      %s73 = sphi 0, %s71
      %s74 = sphi 0, %s73
      %s88 = sphi 0, %s74
      %s94 = sphi 0, %s96
      %s97 = sphi 0, %s94
      %s98 = sphi 0, %s97
      %s114 = sphi 0, %s98
    $region4: #{tpu_custom_call.1} parent=1 // loop_header_branch
      %19 = sbr.rel (%p17) target = $region8
    $region5: #{tpu_custom_call.1} parent=1 // loop_body
      %s21 = ssub.s32 %s16, 1
      %s22 = ssub.s32 %s16, 2
      %s23 = sadd.s32 %s16, 1
      %s24 = ssub.s32 %s16, %s23
      %p25 = scmp.eq.s32.totalorder %s24, 0
      %s27 = sadd.s32 %s26, 1
      %s28 = scalar_select %p25, %s26, %s27
      %p31 = pneg %p25
      %p32 = scmp.eq.s32.totalorder %s16, 1
      %p33 = por %p31, %p32
      %p34 = scmp.ne.s32.totalorder %s26, %s29
      %p35 = scmp.eq.s32.totalorder %s16, 0
      %p36 = por %p34, %p35
      %p37 = scmp.ne.s32.totalorder %s26, %s29
      %p38 = scmp.eq.s32.totalorder %s21, 1
      %p39 = por %p37, %p38
      %p40 = scmp.ne.s32.totalorder %s29, %s30
      %p41 = scmp.eq.s32.totalorder %s21, 0
      %p42 = por %p40, %p41
      %p43 = scmp.ne.s32.totalorder %s29, %s30
      %p44 = scmp.eq.s32.totalorder %s22, 1
      %p45 = por %p43, %p44
      %p47 = scmp.ne.s32.totalorder %s30, %s46
      %p48 = scmp.eq.s32.totalorder %s22, 0
      %p49 = por %p47, %p48
      %s51 = sadd.s32 %s50, 1
      %p54 = scmp.eq.s32.totalorder %s16, 1
      %p55 = scmp.ne.s32.totalorder %s50, %s52
      %p56 = scmp.eq.s32.totalorder %s16, 0
      %p57 = por %p55, %p56
      %p58 = scmp.ne.s32.totalorder %s50, %s52
      %p59 = scmp.eq.s32.totalorder %s21, 1
      %p60 = por %p58, %p59
      %p61 = scmp.ne.s32.totalorder %s52, %s53
      %p62 = scmp.eq.s32.totalorder %s21, 0
      %p63 = por %p61, %p62
      %p64 = scmp.ne.s32.totalorder %s52, %s53
      %p65 = scmp.eq.s32.totalorder %s22, 1
      %p66 = por %p64, %p65
      %p68 = scmp.ne.s32.totalorder %s53, %s67
      %p69 = scmp.eq.s32.totalorder %s22, 0
      %p70 = por %p68, %p69
      %s72 = sadd.s32 %s71, 1
      %p75 = scmp.eq.s32.totalorder %s16, 1
      %p76 = scmp.ne.s32.totalorder %s71, %s73
      %p77 = scmp.eq.s32.totalorder %s16, 0
      %p78 = por %p76, %p77
      %p79 = scmp.ne.s32.totalorder %s71, %s73
      %p80 = scmp.eq.s32.totalorder %s21, 1
      %p81 = por %p79, %p80
      %p82 = scmp.ne.s32.totalorder %s73, %s74
      %p83 = scmp.eq.s32.totalorder %s21, 0
      %p84 = por %p82, %p83
      %p85 = scmp.ne.s32.totalorder %s73, %s74
      %p86 = scmp.eq.s32.totalorder %s22, 1
      %p87 = por %p85, %p86
      %p89 = scmp.ne.s32.totalorder %s74, %s88
      %p90 = scmp.eq.s32.totalorder %s22, 0
      %p91 = por %p89, %p90
      %s92 = ssub.s32 %s16, %s23
      %p93 = scmp.eq.s32.totalorder %s92, 0
      %s95 = sadd.s32 %s94, 1
      %s96 = scalar_select %p93, %s94, %s95
      %p99 = pneg %p93
      %p100 = scmp.eq.s32.totalorder %s16, 1
      %p101 = por %p99, %p100
      %p102 = scmp.ne.s32.totalorder %s94, %s97
      %p103 = scmp.eq.s32.totalorder %s16, 0
      %p104 = por %p102, %p103
      %p105 = scmp.ne.s32.totalorder %s94, %s97
      %p106 = scmp.eq.s32.totalorder %s21, 1
      %p107 = por %p105, %p106
      %p108 = scmp.ne.s32.totalorder %s97, %s98
      %p109 = scmp.eq.s32.totalorder %s21, 0
      %p110 = por %p108, %p109
      %p111 = scmp.ne.s32.totalorder %s97, %s98
      %p112 = scmp.eq.s32.totalorder %s22, 1
      %p113 = por %p111, %p112
      %p115 = scmp.ne.s32.totalorder %s98, %s114
      %p116 = scmp.eq.s32.totalorder %s22, 0
      %p117 = por %p115, %p116
      %p118 = scmp.le.s32.totalorder 1, %s16
      %p119 = scmp.lt.s32.totalorder %s16, 3
      %p120 = pnand %p118, %p119
      %p121 = pneg %p120
      // Predicated region
      $region9: #{tpu_custom_call.1} parent=5 // pred_check
        _
      $region10: #{tpu_custom_call.1} parent=5 // pred_check_branch
        %123 = sbr.rel (%p120) target = $region12
      $region11: #{tpu_custom_call.1} parent=5 // pred_region
        %s124 = ssub.s32 %s16, 1
        // Predicated region
        $region13: #{tpu_custom_call.1} parent=11 // pred_check
          %p125 = pneg %p63
        $region14: #{tpu_custom_call.1} parent=11 // pred_check_branch
          %127 = sbr.rel (%p125) target = $region16
        $region15: #{tpu_custom_call.1} parent=11 // pred_region
          %s129 = ssub.s32 1024, 1024
          %130 = vsyncadd [#allocation6], %s129
          %s131 = sshll.u32 [#allocation5], 4
          %s132 = int_to_ptr.vmem [resolvable:$true] %s131
          %137 = dma.hbm_to_vmem [thread:$0]  %s1, 1024, %s132, [#allocation6], 64, 64, 4
        $region16: #{tpu_custom_call.1} parent=11 // pred_fallthru
          _
        // Predicated region
        $region17: #{tpu_custom_call.1} parent=11 // pred_check
          %p138 = pneg %p84
        $region18: #{tpu_custom_call.1} parent=11 // pred_check_branch
          %140 = sbr.rel (%p138) target = $region20
        $region19: #{tpu_custom_call.1} parent=11 // pred_region
          %s142 = ssub.s32 1024, 1024
          %143 = vsyncadd [#allocation6], %s142
          %s144 = sshll.u32 [#allocation7], 4
          %s145 = int_to_ptr.vmem [resolvable:$true] %s144
          %150 = dma.hbm_to_vmem [thread:$0]  %s2, 1024, %s145, [#allocation6], 64, 64, 4
        $region20: #{tpu_custom_call.1} parent=11 // pred_fallthru
          _
      $region12: #{tpu_custom_call.1} parent=5 // pred_fallthru
        _
      %p151 = scmp.lt.s32.totalorder %s16, 2
      // Predicated region
      $region21: #{tpu_custom_call.1} parent=5 // pred_check
        %p152 = pneg %p151
      $region22: #{tpu_custom_call.1} parent=5 // pred_check_branch
        %154 = sbr.rel (%p152) target = $region24
      $region23: #{tpu_custom_call.1} parent=5 // pred_region
        // Predicated region
        $region25: #{tpu_custom_call.1} parent=23 // pred_check
          %p155 = pneg %p36
        $region26: #{tpu_custom_call.1} parent=23 // pred_check_branch
          %157 = sbr.rel (%p155) target = $region28
        $region27: #{tpu_custom_call.1} parent=23 // pred_region
          %s158 = sand.u32 %s26, 1
          %s159 = scalar_lea.sflag [#allocation3], %s158
          %s160 = sand.u32 %s26, 1
          %s161 = smul.addr %s160, 64
          %s162 = scalar_lea.vmem [#allocation2], %s161
          %s163 = smul.u32 16, %s16
          %s165 = ssub.s32 1024, 1024
          %166 = vsyncadd %s159, %s165
          %s167 = smul.addr %s163, 64
          %s168 = scalar_lea.hbm %s0, %s167
          %s169 = sshll.u32 %s162, 4
          %s170 = int_to_ptr.vmem [resolvable:$true] %s169
          %175 = dma.hbm_to_vmem [thread:$0]  %s168, 1024, %s170, %s159, 64, 64, 4
        $region28: #{tpu_custom_call.1} parent=23 // pred_fallthru
          _
      $region24: #{tpu_custom_call.1} parent=5 // pred_fallthru
        _
      %p176 = scmp.le.s32.totalorder 1, %s16
      %p177 = scmp.lt.s32.totalorder %s16, 3
      %p178 = pnand %p176, %p177
      %p179 = pneg %p178
      // Predicated region
      $region29: #{tpu_custom_call.1} parent=5 // pred_check
        _
      $region30: #{tpu_custom_call.1} parent=5 // pred_check_branch
        %181 = sbr.rel (%p178) target = $region32
      $region31: #{tpu_custom_call.1} parent=5 // pred_region
        %s182 = ssub.s32 %s16, 1
        %s183 = sand.u32 %s29, 1
        %s184 = scalar_lea.sflag [#allocation3], %s183
        %s185 = sand.u32 %s29, 1
        %s186 = smul.addr %s185, 64
        %s187 = scalar_lea.vmem [#allocation2], %s186
        // Predicated region
        $region33: #{tpu_custom_call.1} parent=31 // pred_check
          %p188 = pneg %p42
        $region34: #{tpu_custom_call.1} parent=31 // pred_check_branch
          %190 = sbr.rel (%p188) target = $region36
        $region35: #{tpu_custom_call.1} parent=31 // pred_region
          %191 = dma.done %s184, 1024
        $region36: #{tpu_custom_call.1} parent=31 // pred_fallthru
          _
        // Predicated region
        $region37: #{tpu_custom_call.1} parent=31 // pred_check
          %p192 = pneg %p63
        $region38: #{tpu_custom_call.1} parent=31 // pred_check_branch
          %194 = sbr.rel (%p192) target = $region40
        $region39: #{tpu_custom_call.1} parent=31 // pred_region
          %195 = dma.done [#allocation6], 1024
        $region40: #{tpu_custom_call.1} parent=31 // pred_fallthru
          _
        // Predicated region
        $region41: #{tpu_custom_call.1} parent=31 // pred_check
          %p196 = pneg %p84
        $region42: #{tpu_custom_call.1} parent=31 // pred_check_branch
          %198 = sbr.rel (%p196) target = $region44
        $region43: #{tpu_custom_call.1} parent=31 // pred_region
          %199 = dma.done [#allocation6], 1024
        $region44: #{tpu_custom_call.1} parent=31 // pred_fallthru
          _
        %s200 = sand.u32 %s29, 1
        %s201 = scalar_lea.sflag [#allocation3], %s200
        %s202 = sand.u32 %s29, 1
        %s203 = smul.addr %s202, 64
        %s204 = scalar_lea.vmem [#allocation2], %s203
        %p205 = pneg %p42
        %p206 = pneg %p39
        %p207 = pneg %p63
        %p208 = pneg %p60
        %p209 = pneg %p84
        %p210 = pneg %p81
        %p211 = pneg %p110
        %p212 = pneg %p107
        %s213 = sand.u32 %s97, 1
        %s214 = scalar_lea.sflag [#allocation4], %s213
        %s215 = sand.u32 %s97, 1
        %s216 = smul.addr %s215, 128
        %s217 = scalar_lea.vmem [#allocation8], %s216
        %s218 = smul.u32 16, %s21
        %s219 = smul.u32 16, %s21
        %v221 = vld [vmem:[%s187] sm:$0xf]
        %v222 = vld [vmem:[%s187 + $0x4] sm:$0xf]
        %v223 = vld [vmem:[%s187 + $0x8] sm:$0xf]
        %v224 = vld [vmem:[%s187 + $0xc] sm:$0xf]
        %v225 = vld [vmem:[%s187 + $0x10] sm:$0xf]
        %v226 = vld [vmem:[%s187 + $0x14] sm:$0xf]
        %v227 = vld [vmem:[%s187 + $0x18] sm:$0xf]
        %v228 = vld [vmem:[%s187 + $0x1c] sm:$0xf]
        %v229 = vld [vmem:[%s187 + $0x20] sm:$0xf]
        %v230 = vld [vmem:[%s187 + $0x24] sm:$0xf]
        %v231 = vld [vmem:[%s187 + $0x28] sm:$0xf]
        %v232 = vld [vmem:[%s187 + $0x2c] sm:$0xf]
        %v233 = vld [vmem:[%s187 + $0x30] sm:$0xf]
        %v234 = vld [vmem:[%s187 + $0x34] sm:$0xf]
        %v235 = vld [vmem:[%s187 + $0x38] sm:$0xf]
        %v236 = vld [vmem:[%s187 + $0x3c] sm:$0xf]
        %v237 = vld [vmem:[#allocation5] sm:$0xf]
        %v238 = vld [vmem:[#allocation5 + $0x4] sm:$0xf]
        %v239 = vld [vmem:[#allocation5 + $0x8] sm:$0xf]
        %v240 = vld [vmem:[#allocation5 + $0xc] sm:$0xf]
        %v241 = vld [vmem:[#allocation5 + $0x10] sm:$0xf]
        %v242 = vld [vmem:[#allocation5 + $0x14] sm:$0xf]
        %v243 = vld [vmem:[#allocation5 + $0x18] sm:$0xf]
        %v244 = vld [vmem:[#allocation5 + $0x1c] sm:$0xf]
        %v245 = vld [vmem:[#allocation5 + $0x20] sm:$0xf]
        %v246 = vld [vmem:[#allocation5 + $0x24] sm:$0xf]
        %v247 = vld [vmem:[#allocation5 + $0x28] sm:$0xf]
        %v248 = vld [vmem:[#allocation5 + $0x2c] sm:$0xf]
        %v249 = vld [vmem:[#allocation5 + $0x30] sm:$0xf]
        %v250 = vld [vmem:[#allocation5 + $0x34] sm:$0xf]
        %v251 = vld [vmem:[#allocation5 + $0x38] sm:$0xf]
        %v252 = vld [vmem:[#allocation5 + $0x3c] sm:$0xf]
        %v269 = vunpack.c.l.b16 %v221
        %v270 = vunpack.c.l.b16 %v222
        %v271 = vunpack.c.l.b16 %v223
        %v272 = vunpack.c.l.b16 %v224
        %v273 = vunpack.c.l.b16 %v225
        %v274 = vunpack.c.l.b16 %v226
        %v275 = vunpack.c.l.b16 %v227
        %v276 = vunpack.c.l.b16 %v228
        %v277 = vunpack.c.l.b16 %v229
        %v278 = vunpack.c.l.b16 %v230
        %v279 = vunpack.c.l.b16 %v231
        %v280 = vunpack.c.l.b16 %v232
        %v281 = vunpack.c.l.b16 %v233
        %v282 = vunpack.c.l.b16 %v234
        %v283 = vunpack.c.l.b16 %v235
        %v284 = vunpack.c.l.b16 %v236
        %v285 = vpack.c.b16 %v270, %v269
        %v286 = vpack.c.b16 %v272, %v271
        %v287 = vpack.c.b16 %v274, %v273
        %v288 = vpack.c.b16 %v276, %v275
        %v289 = vpack.c.b16 %v278, %v277
        %v290 = vpack.c.b16 %v280, %v279
        %v291 = vpack.c.b16 %v282, %v281
        %v292 = vpack.c.b16 %v284, %v283
        %v317 = vunpack.c.l.b16 %v237
        %v318 = vunpack.c.l.b16 %v238
        %v319 = vunpack.c.l.b16 %v239
        %v320 = vunpack.c.l.b16 %v240
        %v321 = vunpack.c.l.b16 %v241
        %v322 = vunpack.c.l.b16 %v242
        %v323 = vunpack.c.l.b16 %v243
        %v324 = vunpack.c.l.b16 %v244
        %v325 = vunpack.c.l.b16 %v245
        %v326 = vunpack.c.l.b16 %v246
        %v327 = vunpack.c.l.b16 %v247
        %v328 = vunpack.c.l.b16 %v248
        %v329 = vunpack.c.l.b16 %v249
        %v330 = vunpack.c.l.b16 %v250
        %v331 = vunpack.c.l.b16 %v251
        %v332 = vunpack.c.l.b16 %v252
        %v333 = vpack.c.b16 %v318, %v317
        %v334 = vpack.c.b16 %v320, %v319
        %v335 = vpack.c.b16 %v322, %v321
        %v336 = vpack.c.b16 %v324, %v323
        %v337 = vpack.c.b16 %v326, %v325
        %v338 = vpack.c.b16 %v328, %v327
        %v339 = vpack.c.b16 %v330, %v329
        %v340 = vpack.c.b16 %v332, %v331
        %349 = vmatprep.subr.bf16.mxu0 0
        %350 = vmatpush1.bf16.msra.mxu0 %v340
        %351 = vmatprep.subr.bf16.mxu0 0
        %352 = vmatpush1.bf16.msra.mxu0 %v339
        %353 = vmatprep.subr.bf16.mxu0 0
        %354 = vmatpush1.bf16.msra.mxu0 %v338
        %355 = vmatprep.subr.bf16.mxu0 0
        %356 = vmatpush1.bf16.msra.mxu0 %v337
        %357 = vmatprep.subr.bf16.mxu0 0
        %358 = vmatpush1.bf16.msra.mxu0 %v336
        %359 = vmatprep.subr.bf16.mxu0 0
        %360 = vmatpush1.bf16.msra.mxu0 %v335
        %361 = vmatprep.subr.bf16.mxu0 0
        %362 = vmatpush1.bf16.msra.mxu0 %v334
        %363 = vmatprep.subr.bf16.mxu0 0
        %364 = vmatpush1.bf16.msra.mxu0 %v333
        %365 = vmatprep.subr.bf16.mxu0 0
        %366 = vmatpush2.bf16.msra.mxu0 0
        %367 = vmatprep.subr.bf16.mxu0 0
        %368 = vmatpush2.bf16.msra.mxu0 0
        %369 = vmatprep.subr.bf16.mxu0 0
        %370 = vmatpush2.bf16.msra.mxu0 0
        %371 = vmatprep.subr.bf16.mxu0 0
        %372 = vmatpush2.bf16.msra.mxu0 0
        %373 = vmatprep.subr.bf16.mxu0 0
        %374 = vmatpush2.bf16.msra.mxu0 0
        %375 = vmatprep.subr.bf16.mxu0 0
        %376 = vmatpush2.bf16.msra.mxu0 0
        %377 = vmatprep.subr.bf16.mxu0 0
        %378 = vmatpush2.bf16.msra.mxu0 0
        %379 = vmatprep.subr.bf16.mxu0 0
        %380 = vmatpush2.bf16.msra.mxu0 0
        %381 = vmatprep.mubr.bf16.mxu0 0
        %382 = vmatmul.mubr.bf16.gmra.mxu0 %v285
        %v383 = vpop.f32.mrf.mxu0
        %v384 = vadd.f32 0.0, %v383
        %v385 = vpop.f32.mrf.mxu0
        %v386 = vpop.f32.mrf.mxu0
        %v387 = vadd.f32 0.0, %v386
        %v388 = vpop.f32.mrf.mxu0
        %389 = vmatprep.mubr.bf16.mxu0 0
        %390 = vmatmul.mubr.bf16.gmra.mxu0 %v286
        %v391 = vpop.f32.mrf.mxu0
        %v392 = vadd.f32 0.0, %v391
        %v393 = vpop.f32.mrf.mxu0
        %v394 = vpop.f32.mrf.mxu0
        %v395 = vadd.f32 0.0, %v394
        %v396 = vpop.f32.mrf.mxu0
        %397 = vmatprep.mubr.bf16.mxu0 0
        %398 = vmatmul.mubr.bf16.gmra.mxu0 %v287
        %v399 = vpop.f32.mrf.mxu0
        %v400 = vadd.f32 0.0, %v399
        %v401 = vpop.f32.mrf.mxu0
        %v402 = vpop.f32.mrf.mxu0
        %v403 = vadd.f32 0.0, %v402
        %v404 = vpop.f32.mrf.mxu0
        %405 = vmatprep.mubr.bf16.mxu0 0
        %406 = vmatmul.mubr.bf16.gmra.mxu0 %v288
        %v407 = vpop.f32.mrf.mxu0
        %v408 = vadd.f32 0.0, %v407
        %v409 = vpop.f32.mrf.mxu0
        %v410 = vpop.f32.mrf.mxu0
        %v411 = vadd.f32 0.0, %v410
        %v412 = vpop.f32.mrf.mxu0
        %413 = vmatprep.mubr.bf16.mxu0 0
        %414 = vmatmul.mubr.bf16.gmra.mxu0 %v289
        %v415 = vpop.f32.mrf.mxu0
        %v416 = vadd.f32 0.0, %v415
        %v417 = vpop.f32.mrf.mxu0
        %v418 = vpop.f32.mrf.mxu0
        %v419 = vadd.f32 0.0, %v418
        %v420 = vpop.f32.mrf.mxu0
        %421 = vmatprep.mubr.bf16.mxu0 0
        %422 = vmatmul.mubr.bf16.gmra.mxu0 %v290
        %v423 = vpop.f32.mrf.mxu0
        %v424 = vadd.f32 0.0, %v423
        %v425 = vpop.f32.mrf.mxu0
        %v426 = vpop.f32.mrf.mxu0
        %v427 = vadd.f32 0.0, %v426
        %v428 = vpop.f32.mrf.mxu0
        %429 = vmatprep.mubr.bf16.mxu0 0
        %430 = vmatmul.mubr.bf16.gmra.mxu0 %v291
        %v431 = vpop.f32.mrf.mxu0
        %v432 = vadd.f32 0.0, %v431
        %v433 = vpop.f32.mrf.mxu0
        %v434 = vpop.f32.mrf.mxu0
        %v435 = vadd.f32 0.0, %v434
        %v436 = vpop.f32.mrf.mxu0
        %437 = vmatprep.mubr.bf16.mxu0 0
        %438 = vmatmul.mubr.bf16.gmra.mxu0 %v292
        %v439 = vpop.f32.mrf.mxu0
        %v440 = vadd.f32 0.0, %v439
        %v441 = vpop.f32.mrf.mxu0
        %v442 = vpop.f32.mrf.mxu0
        %v443 = vadd.f32 0.0, %v442
        %v444 = vpop.f32.mrf.mxu0
        %445 = vdwg.mxu0
        %v446 = vmax.f32 %v384, 0.0
        %v447 = vmax.f32 %v387, 0.0
        %v448 = vmax.f32 %v392, 0.0
        %v449 = vmax.f32 %v395, 0.0
        %v450 = vmax.f32 %v400, 0.0
        %v451 = vmax.f32 %v403, 0.0
        %v452 = vmax.f32 %v408, 0.0
        %v453 = vmax.f32 %v411, 0.0
        %v454 = vmax.f32 %v416, 0.0
        %v455 = vmax.f32 %v419, 0.0
        %v456 = vmax.f32 %v424, 0.0
        %v457 = vmax.f32 %v427, 0.0
        %v458 = vmax.f32 %v432, 0.0
        %v459 = vmax.f32 %v435, 0.0
        %v460 = vmax.f32 %v440, 0.0
        %v461 = vmax.f32 %v443, 0.0
        %v462 = vpack.c.bf16 %v447, %v446
        %v463 = vpack.c.bf16 %v449, %v448
        %v464 = vpack.c.bf16 %v451, %v450
        %v465 = vpack.c.bf16 %v453, %v452
        %v466 = vpack.c.bf16 %v455, %v454
        %v467 = vpack.c.bf16 %v457, %v456
        %v468 = vpack.c.bf16 %v459, %v458
        %v469 = vpack.c.bf16 %v461, %v460
        %v470 = vld [vmem:[#allocation7] sm:$0xf]
        %v471 = vld [vmem:[#allocation7 + $0x4] sm:$0xf]
        %v472 = vld [vmem:[#allocation7 + $0x8] sm:$0xf]
        %v473 = vld [vmem:[#allocation7 + $0xc] sm:$0xf]
        %v474 = vld [vmem:[#allocation7 + $0x10] sm:$0xf]
        %v475 = vld [vmem:[#allocation7 + $0x14] sm:$0xf]
        %v476 = vld [vmem:[#allocation7 + $0x18] sm:$0xf]
        %v477 = vld [vmem:[#allocation7 + $0x1c] sm:$0xf]
        %v478 = vld [vmem:[#allocation7 + $0x20] sm:$0xf]
        %v479 = vld [vmem:[#allocation7 + $0x24] sm:$0xf]
        %v480 = vld [vmem:[#allocation7 + $0x28] sm:$0xf]
        %v481 = vld [vmem:[#allocation7 + $0x2c] sm:$0xf]
        %v482 = vld [vmem:[#allocation7 + $0x30] sm:$0xf]
        %v483 = vld [vmem:[#allocation7 + $0x34] sm:$0xf]
        %v484 = vld [vmem:[#allocation7 + $0x38] sm:$0xf]
        %v485 = vld [vmem:[#allocation7 + $0x3c] sm:$0xf]
        %v502 = vunpack.c.l.b16 %v470
        %v503 = vunpack.c.l.b16 %v471
        %v504 = vunpack.c.l.b16 %v472
        %v505 = vunpack.c.l.b16 %v473
        %v506 = vunpack.c.l.b16 %v474
        %v507 = vunpack.c.l.b16 %v475
        %v508 = vunpack.c.l.b16 %v476
        %v509 = vunpack.c.l.b16 %v477
        %v510 = vunpack.c.l.b16 %v478
        %v511 = vunpack.c.l.b16 %v479
        %v512 = vunpack.c.l.b16 %v480
        %v513 = vunpack.c.l.b16 %v481
        %v514 = vunpack.c.l.b16 %v482
        %v515 = vunpack.c.l.b16 %v483
        %v516 = vunpack.c.l.b16 %v484
        %v517 = vunpack.c.l.b16 %v485
        %v518 = vpack.c.b16 %v503, %v502
        %v519 = vpack.c.b16 %v505, %v504
        %v520 = vpack.c.b16 %v507, %v506
        %v521 = vpack.c.b16 %v509, %v508
        %v522 = vpack.c.b16 %v511, %v510
        %v523 = vpack.c.b16 %v513, %v512
        %v524 = vpack.c.b16 %v515, %v514
        %v525 = vpack.c.b16 %v517, %v516
        %534 = vmatprep.subr.bf16.mxu0 0
        %535 = vmatpush1.bf16.msra.mxu0 %v525
        %536 = vmatprep.subr.bf16.mxu0 0
        %537 = vmatpush1.bf16.msra.mxu0 %v524
        %538 = vmatprep.subr.bf16.mxu0 0
        %539 = vmatpush1.bf16.msra.mxu0 %v523
        %540 = vmatprep.subr.bf16.mxu0 0
        %541 = vmatpush1.bf16.msra.mxu0 %v522
        %542 = vmatprep.subr.bf16.mxu0 0
        %543 = vmatpush1.bf16.msra.mxu0 %v521
        %544 = vmatprep.subr.bf16.mxu0 0
        %545 = vmatpush1.bf16.msra.mxu0 %v520
        %546 = vmatprep.subr.bf16.mxu0 0
        %547 = vmatpush1.bf16.msra.mxu0 %v519
        %548 = vmatprep.subr.bf16.mxu0 0
        %549 = vmatpush1.bf16.msra.mxu0 %v518
        %550 = vmatprep.subr.bf16.mxu0 0
        %551 = vmatpush2.bf16.msra.mxu0 0
        %552 = vmatprep.subr.bf16.mxu0 0
        %553 = vmatpush2.bf16.msra.mxu0 0
        %554 = vmatprep.subr.bf16.mxu0 0
        %555 = vmatpush2.bf16.msra.mxu0 0
        %556 = vmatprep.subr.bf16.mxu0 0
        %557 = vmatpush2.bf16.msra.mxu0 0
        %558 = vmatprep.subr.bf16.mxu0 0
        %559 = vmatpush2.bf16.msra.mxu0 0
        %560 = vmatprep.subr.bf16.mxu0 0
        %561 = vmatpush2.bf16.msra.mxu0 0
        %562 = vmatprep.subr.bf16.mxu0 0
        %563 = vmatpush2.bf16.msra.mxu0 0
        %564 = vmatprep.subr.bf16.mxu0 0
        %565 = vmatpush2.bf16.msra.mxu0 0
        %566 = vmatprep.mubr.bf16.mxu0 0
        %567 = vmatmul.mubr.bf16.gmra.mxu0 %v462
        %v568 = vpop.f32.mrf.mxu0
        %v569 = vadd.f32 0.0, %v568
        %v570 = vpop.f32.mrf.mxu0
        %v571 = vpop.f32.mrf.mxu0
        %v572 = vadd.f32 0.0, %v571
        %v573 = vpop.f32.mrf.mxu0
        %574 = vmatprep.mubr.bf16.mxu0 0
        %575 = vmatmul.mubr.bf16.gmra.mxu0 %v463
        %v576 = vpop.f32.mrf.mxu0
        %v577 = vadd.f32 0.0, %v576
        %v578 = vpop.f32.mrf.mxu0
        %v579 = vpop.f32.mrf.mxu0
        %v580 = vadd.f32 0.0, %v579
        %v581 = vpop.f32.mrf.mxu0
        %582 = vmatprep.mubr.bf16.mxu0 0
        %583 = vmatmul.mubr.bf16.gmra.mxu0 %v464
        %v584 = vpop.f32.mrf.mxu0
        %v585 = vadd.f32 0.0, %v584
        %v586 = vpop.f32.mrf.mxu0
        %v587 = vpop.f32.mrf.mxu0
        %v588 = vadd.f32 0.0, %v587
        %v589 = vpop.f32.mrf.mxu0
        %590 = vmatprep.mubr.bf16.mxu0 0
        %591 = vmatmul.mubr.bf16.gmra.mxu0 %v465
        %v592 = vpop.f32.mrf.mxu0
        %v593 = vadd.f32 0.0, %v592
        %v594 = vpop.f32.mrf.mxu0
        %v595 = vpop.f32.mrf.mxu0
        %v596 = vadd.f32 0.0, %v595
        %v597 = vpop.f32.mrf.mxu0
        %598 = vmatprep.mubr.bf16.mxu0 0
        %599 = vmatmul.mubr.bf16.gmra.mxu0 %v466
        %v600 = vpop.f32.mrf.mxu0
        %v601 = vadd.f32 0.0, %v600
        %v602 = vpop.f32.mrf.mxu0
        %v603 = vpop.f32.mrf.mxu0
        %v604 = vadd.f32 0.0, %v603
        %v605 = vpop.f32.mrf.mxu0
        %606 = vmatprep.mubr.bf16.mxu0 0
        %607 = vmatmul.mubr.bf16.gmra.mxu0 %v467
        %v608 = vpop.f32.mrf.mxu0
        %v609 = vadd.f32 0.0, %v608
        %v610 = vpop.f32.mrf.mxu0
        %v611 = vpop.f32.mrf.mxu0
        %v612 = vadd.f32 0.0, %v611
        %v613 = vpop.f32.mrf.mxu0
        %614 = vmatprep.mubr.bf16.mxu0 0
        %615 = vmatmul.mubr.bf16.gmra.mxu0 %v468
        %v616 = vpop.f32.mrf.mxu0
        %v617 = vadd.f32 0.0, %v616
        %v618 = vpop.f32.mrf.mxu0
        %v619 = vpop.f32.mrf.mxu0
        %v620 = vadd.f32 0.0, %v619
        %v621 = vpop.f32.mrf.mxu0
        %622 = vmatprep.mubr.bf16.mxu0 0
        %623 = vmatmul.mubr.bf16.gmra.mxu0 %v469
        %v624 = vpop.f32.mrf.mxu0
        %v625 = vadd.f32 0.0, %v624
        %v626 = vpop.f32.mrf.mxu0
        %v627 = vpop.f32.mrf.mxu0
        %v628 = vadd.f32 0.0, %v627
        %v629 = vpop.f32.mrf.mxu0
        %630 = vdwg.mxu0
        %v631 = vxor.u32 %v569, 2147483648
        %v632 = vxor.u32 %v572, 2147483648
        %v633 = vxor.u32 %v577, 2147483648
        %v634 = vxor.u32 %v580, 2147483648
        %v635 = vxor.u32 %v585, 2147483648
        %v636 = vxor.u32 %v588, 2147483648
        %v637 = vxor.u32 %v593, 2147483648
        %v638 = vxor.u32 %v596, 2147483648
        %v639 = vxor.u32 %v601, 2147483648
        %v640 = vxor.u32 %v604, 2147483648
        %v641 = vxor.u32 %v609, 2147483648
        %v642 = vxor.u32 %v612, 2147483648
        %v643 = vxor.u32 %v617, 2147483648
        %v644 = vxor.u32 %v620, 2147483648
        %v645 = vxor.u32 %v625, 2147483648
        %v646 = vxor.u32 %v628, 2147483648
        %v647 = vmul.f32 %v631, 1.442695
        %v648 = vpow.pop %v647
        %v649 = vmul.f32 %v632, 1.442695
        %v650 = vpow.pop %v649
        %v651 = vmul.f32 %v633, 1.442695
        %v652 = vpow.pop %v651
        %v653 = vmul.f32 %v634, 1.442695
        %v654 = vpow.pop %v653
        %v655 = vmul.f32 %v635, 1.442695
        %v656 = vpow.pop %v655
        %v657 = vmul.f32 %v636, 1.442695
        %v658 = vpow.pop %v657
        %v659 = vmul.f32 %v637, 1.442695
        %v660 = vpow.pop %v659
        %v661 = vmul.f32 %v638, 1.442695
        %v662 = vpow.pop %v661
        %v663 = vmul.f32 %v639, 1.442695
        %v664 = vpow.pop %v663
        %v665 = vmul.f32 %v640, 1.442695
        %v666 = vpow.pop %v665
        %v667 = vmul.f32 %v641, 1.442695
        %v668 = vpow.pop %v667
        %v669 = vmul.f32 %v642, 1.442695
        %v670 = vpow.pop %v669
        %v671 = vmul.f32 %v643, 1.442695
        %v672 = vpow.pop %v671
        %v673 = vmul.f32 %v644, 1.442695
        %v674 = vpow.pop %v673
        %v675 = vmul.f32 %v645, 1.442695
        %v676 = vpow.pop %v675
        %v677 = vmul.f32 %v646, 1.442695
        %v678 = vpow.pop %v677
        %v679 = vadd.f32 %v648, 1.0
        %v680 = vadd.f32 %v650, 1.0
        %v681 = vadd.f32 %v652, 1.0
        %v682 = vadd.f32 %v654, 1.0
        %v683 = vadd.f32 %v656, 1.0
        %v684 = vadd.f32 %v658, 1.0
        %v685 = vadd.f32 %v660, 1.0
        %v686 = vadd.f32 %v662, 1.0
        %v687 = vadd.f32 %v664, 1.0
        %v688 = vadd.f32 %v666, 1.0
        %v689 = vadd.f32 %v668, 1.0
        %v690 = vadd.f32 %v670, 1.0
        %v691 = vadd.f32 %v672, 1.0
        %v692 = vadd.f32 %v674, 1.0
        %v693 = vadd.f32 %v676, 1.0
        %v694 = vadd.f32 %v678, 1.0
        %v695 = vrcp.pop %v679
        %v696 = vmul.f32 1.0, %v695
        %v697 = vrcp.pop %v680
        %v698 = vmul.f32 1.0, %v697
        %v699 = vrcp.pop %v681
        %v700 = vmul.f32 1.0, %v699
        %v701 = vrcp.pop %v682
        %v702 = vmul.f32 1.0, %v701
        %v703 = vrcp.pop %v683
        %v704 = vmul.f32 1.0, %v703
        %v705 = vrcp.pop %v684
        %v706 = vmul.f32 1.0, %v705
        %v707 = vrcp.pop %v685
        %v708 = vmul.f32 1.0, %v707
        %v709 = vrcp.pop %v686
        %v710 = vmul.f32 1.0, %v709
        %v711 = vrcp.pop %v687
        %v712 = vmul.f32 1.0, %v711
        %v713 = vrcp.pop %v688
        %v714 = vmul.f32 1.0, %v713
        %v715 = vrcp.pop %v689
        %v716 = vmul.f32 1.0, %v715
        %v717 = vrcp.pop %v690
        %v718 = vmul.f32 1.0, %v717
        %v719 = vrcp.pop %v691
        %v720 = vmul.f32 1.0, %v719
        %v721 = vrcp.pop %v692
        %v722 = vmul.f32 1.0, %v721
        %v723 = vrcp.pop %v693
        %v724 = vmul.f32 1.0, %v723
        %v725 = vrcp.pop %v694
        %v726 = vmul.f32 1.0, %v725
        %727 = vst [vmem:[%s217] sm:$0xff] %v696
        %728 = vst [vmem:[%s217 + $0x8] sm:$0xff] %v698
        %729 = vst [vmem:[%s217 + $0x10] sm:$0xff] %v700
        %730 = vst [vmem:[%s217 + $0x18] sm:$0xff] %v702
        %731 = vst [vmem:[%s217 + $0x20] sm:$0xff] %v704
        %732 = vst [vmem:[%s217 + $0x28] sm:$0xff] %v706
        %733 = vst [vmem:[%s217 + $0x30] sm:$0xff] %v708
        %734 = vst [vmem:[%s217 + $0x38] sm:$0xff] %v710
        %735 = vst [vmem:[%s217 + $0x40] sm:$0xff] %v712
        %736 = vst [vmem:[%s217 + $0x48] sm:$0xff] %v714
        %737 = vst [vmem:[%s217 + $0x50] sm:$0xff] %v716
        %738 = vst [vmem:[%s217 + $0x58] sm:$0xff] %v718
        %739 = vst [vmem:[%s217 + $0x60] sm:$0xff] %v720
        %740 = vst [vmem:[%s217 + $0x68] sm:$0xff] %v722
        %741 = vst [vmem:[%s217 + $0x70] sm:$0xff] %v724
        %742 = vst [vmem:[%s217 + $0x78] sm:$0xff] %v726
        %s743 = sand.u32 %s97, 1
        %s744 = scalar_lea.sflag [#allocation4], %s743
        %s745 = sand.u32 %s97, 1
        %s746 = smul.addr %s745, 128
        %s747 = scalar_lea.vmem [#allocation8], %s746
        // Predicated region
        $region45: #{tpu_custom_call.1} parent=31 // pred_check
          %p748 = pneg %p107
        $region46: #{tpu_custom_call.1} parent=31 // pred_check_branch
          %750 = sbr.rel (%p748) target = $region48
        $region47: #{tpu_custom_call.1} parent=31 // pred_region
          %s751 = smul.u32 16, %s21
          %s753 = ssub.s32 2048, 2048
          %754 = vsyncadd %s744, %s753
          %s755 = smul.addr %s751, 128
          %s756 = scalar_lea.hbm %s3, %s755
          %s757 = sshll.u32 %s747, 4
          %s758 = int_to_ptr.vmem [resolvable:$true] %s757
          %763 = dma.vmem_to_hbm [thread:$0]  %s758, 2048, %s756, %s744, 128, 128, 8
        $region48: #{tpu_custom_call.1} parent=31 // pred_fallthru
          _
      $region32: #{tpu_custom_call.1} parent=5 // pred_fallthru
        _
      %p764 = scmp.le.s32.totalorder 2, %s16
      // Predicated region
      $region49: #{tpu_custom_call.1} parent=5 // pred_check
        %p765 = pneg %p764
      $region50: #{tpu_custom_call.1} parent=5 // pred_check_branch
        %767 = sbr.rel (%p765) target = $region52
      $region51: #{tpu_custom_call.1} parent=5 // pred_region
        %s768 = ssub.s32 %s16, 2
        // Predicated region
        $region53: #{tpu_custom_call.1} parent=51 // pred_check
          %p769 = pneg %p113
        $region54: #{tpu_custom_call.1} parent=51 // pred_check_branch
          %771 = sbr.rel (%p769) target = $region56
        $region55: #{tpu_custom_call.1} parent=51 // pred_region
          %s772 = sand.u32 %s98, 1
          %s773 = scalar_lea.sflag [#allocation4], %s772
          %s774 = sand.u32 %s98, 1
          %s775 = smul.addr %s774, 128
          %s776 = scalar_lea.vmem [#allocation8], %s775
          %777 = dma.done %s773, 2048
        $region56: #{tpu_custom_call.1} parent=51 // pred_fallthru
          _
      $region52: #{tpu_custom_call.1} parent=5 // pred_fallthru
        _
    $region6: #{tpu_custom_call.1} parent=1 // loop_footer
      %s20 = sadd.s32 1, %s16
    $region7: #{tpu_custom_call.1} parent=1 // loop_footer_branch
      %15 = sbr.rel target = $region3
    $region8: #{tpu_custom_call.1} parent=1 // loop_exit
      _
    %778 = vsyncpa [#allocation3], 1
    %s779 = scalar_lea.sflag [#allocation3], 1
    %780 = vsyncpa %s779, 1
    %781 = vsyncpa [#allocation6], 1
    %782 = vsyncpa [#allocation4], 1
    %s783 = scalar_lea.sflag [#allocation4], 1
    %784 = vsyncpa %s783, 1

</llo_original>
